<compile_context>
chip_gen: v6e
topology: v6e:2x2x1
jax: 0.10.0
libtpu: 0.0.40
codegen_flags: <defaults>
</compile_context>

<pallas_src>
import jax
import jax.numpy as jnp
from jax.experimental import pallas as pl
from jax.experimental.pallas import tpu as pltpu


def attention_layer_kernel(x_ref, wt_ref, bw_ref, v_ref, gamma_ref, beta_ref,
                           o_ref):
    TB, S, H = x_ref.shape
    x = x_ref[...].astype(jnp.float32)                      # (TB, S, H)

    # ---- u = tanh(x @ W^T + b): one bf16 MXU matmul over all TB*S rows -----
    # (TB, S, H) -> (TB*S, H) merges leading dims only (lane dim untouched).
    x2 = x.reshape(TB * S, H)
    u = jnp.tanh(
        jnp.dot(x2.astype(jnp.bfloat16), wt_ref[...],       # wt is bf16
                preferred_element_type=jnp.float32)
        + bw_ref[...])                                      # (TB*S, H) f32

    # ---- scores = V(u): width-1 matmul as VPU multiply + lane reduce -------
    # V bias dropped: constant along the softmax axis => exact no-op.
    scores = jnp.sum(u * v_ref[...], axis=-1, keepdims=True)   # (TB*S, 1)
    s3 = scores.reshape(TB, S, 1)

    # ---- softmax over the sequence axis (dim=1), per batch element ---------
    m = jnp.max(s3, axis=1, keepdims=True)                  # (TB, 1, 1)
    e = jnp.exp(s3 - m)                                     # (TB, S, 1)
    denom = jnp.sum(e, axis=1, keepdims=True)               # (TB, 1, 1)
    attn = e / denom                                        # exact reciprocal

    # TODO(synk): Dropout(p=0.1) is identity in eval mode; training-mode mask
    # (pltpu.prng_seed + pltpu.prng_random_bits) is not implemented here.

    # ---- weighted residual, folded: x + x*attn == x*(1+attn) ---------------
    y = x * (1.0 + attn)                                    # (TB, S, H)

    # ---- LayerNorm over hidden (eps=1e-5, biased variance, affine), f32 ----
    mean = jnp.mean(y, axis=-1, keepdims=True)              # (TB, S, 1)
    var = jnp.mean((y - mean) ** 2, axis=-1, keepdims=True)
    out = (y - mean) * jax.lax.rsqrt(var + 1e-5) * gamma_ref[...] + beta_ref[...]

    o_ref[...] = out.astype(o_ref.dtype)


def _pick_block_batch(B, S, H, *, target_rows=1024, vmem_budget_bytes=24 << 20):
    """Batch elements per grid step.

    - Aim for >= target_rows rows of TB*S per step so the ~0.35us/step pipeline
      overhead is amortized and the MXU/DMA see large blocks (review item 1).
    - Cap TB so (2x double-buffered x) + (2x double-buffered out) + ~6 f32
      in-kernel temporaries fit in ~24 MiB, inside v7x's 32 MiB scoped-VMEM
      default (64 MiB physical) without needing vmem_limit_bytes (item 3).
    - Guarantee >= 2 grid steps whenever B > 1 so ("parallel",) shards across
      both v7x TensorCores and prefetch/writeback can overlap (item 2).
    """
    per_batch_bytes = 10 * S * H * 4          # (2 in + 2 out bufs + ~6 temps) f32
    tb_rows = max(1, -(-target_rows // S))    # cdiv(target_rows, S)
    tb_vmem = max(1, vmem_budget_bytes // per_batch_bytes)
    tb = max(1, min(B, tb_rows, tb_vmem))
    if B > 1:
        tb = min(tb, -(-B // 2))              # at least 2 grid steps
    return tb


def attention_layer(x, W_w, W_b, V_w, V_b, ln_gamma, ln_beta, *,
                    block_batch=None):
    """x: (B, S, H) float32.  Params follow PyTorch nn.Linear conventions:
       W_w: (H, H), W_b: (H,), V_w: (1, H), V_b: (1,), ln_*: (H,).
       block_batch: batch elements per grid step (default: auto).  B need not
       be divisible by block_batch; the wrapper pads and slices."""
    B, S, H = x.shape
    tb = block_batch if block_batch is not None else _pick_block_batch(B, S, H)
    num_blocks = -(-B // tb)                  # cdiv(B, tb)
    B_pad = num_blocks * tb
    x_p = x if B_pad == B else jnp.pad(x, ((0, B_pad - B), (0, 0), (0, 0)))

    wt = jnp.transpose(W_w).astype(jnp.bfloat16)   # bf16 MXU operand (resident)
    bw = W_b.reshape(1, H).astype(jnp.float32)
    v = V_w.reshape(1, H).astype(jnp.float32)      # V weight as a row
    del V_b  # additive constant along the softmax axis -> exact no-op
    gamma = ln_gamma.reshape(1, H).astype(jnp.float32)
    beta = ln_beta.reshape(1, H).astype(jnp.float32)

    out = pl.pallas_call(
        attention_layer_kernel,
        out_shape=jax.ShapeDtypeStruct((B_pad, S, H), x.dtype),
        grid_spec=pltpu.PrefetchScalarGridSpec(
            num_scalar_prefetch=0,
            grid=(num_blocks,),
            in_specs=[
                pl.BlockSpec((tb, S, H), lambda b: (b, 0, 0)),  # x (streamed)
                pl.BlockSpec((H, H), lambda b: (0, 0)),         # W^T (resident, bf16)
                pl.BlockSpec((1, H), lambda b: (0, 0)),         # W bias
                pl.BlockSpec((1, H), lambda b: (0, 0)),         # V weight row
                pl.BlockSpec((1, H), lambda b: (0, 0)),         # LN gamma
                pl.BlockSpec((1, H), lambda b: (0, 0)),         # LN beta
            ],
            out_specs=pl.BlockSpec((tb, S, H), lambda b: (b, 0, 0)),
        ),
        compiler_params=pltpu.CompilerParams(
            dimension_semantics=("parallel",)),
    )(x_p, wt, bw, v, gamma, beta)
    return out if B_pad == B else out[:B]


def reference(x, W_w, W_b, V_w, V_b, ln_gamma, ln_beta):
    u = jnp.tanh(jnp.einsum("bsh,oh->bso", x, W_w) + W_b)
    scores = jnp.einsum("bsh,oh->bso", u, V_w) + V_b          # (B, S, 1)
    attn = jax.nn.softmax(scores, axis=1)
    y = x + x * attn
    mean = jnp.mean(y, axis=-1, keepdims=True)
    var = jnp.mean((y - mean) ** 2, axis=-1, keepdims=True)
    return (y - mean) * jax.lax.rsqrt(var + 1e-5) * ln_gamma + ln_beta


if __name__ == "__main__":
    B, S, H = 2, 8, 32
    key = jax.random.PRNGKey(0)
    kx, kw, kbw, kv, kbv = jax.random.split(key, 5)

    x = jax.random.normal(kx, (B, S, H), dtype=jnp.float32)

    # Deterministic parameter init (uniform, roughly PyTorch Linear scale)
    bound = 1.0 / jnp.sqrt(H)
    W_w = jax.random.uniform(kw, (H, H), jnp.float32, -bound, bound)
    W_b = jax.random.uniform(kbw, (H,), jnp.float32, -bound, bound)
    V_w = jax.random.uniform(kv, (1, H), jnp.float32, -bound, bound)
    V_b = jax.random.uniform(kbv, (1,), jnp.float32, -bound, bound)
    ln_gamma = jnp.ones((H,), jnp.float32)    # PyTorch LayerNorm default
    ln_beta = jnp.zeros((H,), jnp.float32)

    out = attention_layer(x, W_w, W_b, V_w, V_b, ln_gamma, ln_beta)
    out = jax.block_until_ready(out)

    ref = reference(x, W_w, W_b, V_w, V_b, ln_gamma, ln_beta)
    assert out.shape == (B, S, H)
    # Exact softmax reciprocal is restored; the only remaining deviation from
    # the f32 reference is bf16 rounding of the x @ W^T MXU operands, which at
    # H=32 is well within 2e-3.
    assert jnp.allclose(out, ref, atol=2e-3, rtol=2e-3), "mismatch vs reference"

    print("KERNEL_OK")
</pallas_src>

<mosaic_0001>
module attributes {stable_mosaic.version = 11 : i64} {
  func.func @attention_layer_kernel(%arg0: i32, %arg1: memref<1x8x32xf32, #tpu.memory_space<vmem>>, %arg2: memref<32x32xbf16, #tpu.memory_space<vmem>>, %arg3: memref<1x32xf32, #tpu.memory_space<vmem>>, %arg4: memref<1x32xf32, #tpu.memory_space<vmem>>, %arg5: memref<1x32xf32, #tpu.memory_space<vmem>>, %arg6: memref<1x32xf32, #tpu.memory_space<vmem>>, %arg7: memref<1x8x32xf32, #tpu.memory_space<vmem>>) attributes {dimension_semantics = [#tpu.dimension_semantics<parallel>], iteration_bounds = array<i64: 2>, scalar_prefetch = 0 : i64, scratch_operands = 0 : i64, tpu.core_type = #tpu.core_type<tc>, window_params = [{transform_indices = @transform_0, window_bounds = array<i64: 1, 8, 32>}, {pipeline_mode = #tpu.pipeline_mode<synchronous>, transform_indices = @transform_1, window_bounds = array<i64: 32, 32>}, {pipeline_mode = #tpu.pipeline_mode<synchronous>, transform_indices = @transform_2, window_bounds = array<i64: 1, 32>}, {pipeline_mode = #tpu.pipeline_mode<synchronous>, transform_indices = @transform_3, window_bounds = array<i64: 1, 32>}, {pipeline_mode = #tpu.pipeline_mode<synchronous>, transform_indices = @transform_4, window_bounds = array<i64: 1, 32>}, {pipeline_mode = #tpu.pipeline_mode<synchronous>, transform_indices = @transform_5, window_bounds = array<i64: 1, 32>}, {transform_indices = @transform_6, window_bounds = array<i64: 1, 8, 32>}]} {
    %c0 = arith.constant 0 : index
    %c0_0 = arith.constant 0 : index
    %c0_1 = arith.constant 0 : index
    %0 = vector.load %arg1[%c0, %c0_0, %c0_1] : memref<1x8x32xf32, #tpu.memory_space<vmem>>, vector<1x8x32xf32>
    %1 = vector.shape_cast %0 : vector<1x8x32xf32> to vector<8x32xf32>
    %2 = arith.truncf %1 : vector<8x32xf32> to vector<8x32xbf16>
    %c0_2 = arith.constant 0 : index
    %c0_3 = arith.constant 0 : index
    %3 = vector.load %arg2[%c0_2, %c0_3] : memref<32x32xbf16, #tpu.memory_space<vmem>>, vector<32x32xbf16>
    %cst = arith.constant dense<0.000000e+00> : vector<8x32xf32>
    %4 = tpu.matmul %2, %3, %cst {dimension_numbers = #tpu.dot_dimension_numbers<[1], [0], [0], [1], [0, 0, 1, 1], [], []>} : vector<8x32xbf16>, vector<32x32xbf16>, vector<8x32xf32> -> vector<8x32xf32>
    %c0_4 = arith.constant 0 : index
    %c0_5 = arith.constant 0 : index
    %5 = vector.load %arg3[%c0_4, %c0_5] : memref<1x32xf32, #tpu.memory_space<vmem>>, vector<1x32xf32>
    %6 = vector.broadcast %5 : vector<1x32xf32> to vector<8x32xf32>
    %7 = arith.addf %4, %6 : vector<8x32xf32>
    %8 = math.tanh %7 : vector<8x32xf32>
    %c0_6 = arith.constant 0 : index
    %c0_7 = arith.constant 0 : index
    %9 = vector.load %arg4[%c0_6, %c0_7] : memref<1x32xf32, #tpu.memory_space<vmem>>, vector<1x32xf32>
    %10 = vector.broadcast %9 : vector<1x32xf32> to vector<8x32xf32>
    %11 = arith.mulf %8, %10 : vector<8x32xf32>
    %cst_8 = arith.constant dense<0.000000e+00> : vector<8xf32>
    %12 = vector.multi_reduction <add>, %11, %cst_8 [1] : vector<8x32xf32> to vector<8xf32>
    %13 = vector.shape_cast %12 : vector<8xf32> to vector<8x1xf32>
    %14 = vector.shape_cast %13 : vector<8x1xf32> to vector<1x8x1xf32>
    %cst_9 = arith.constant dense<0xFF800000> : vector<1x1xf32>
    %15 = vector.multi_reduction <maximumf>, %14, %cst_9 [1] : vector<1x8x1xf32> to vector<1x1xf32>
    %16 = vector.shape_cast %15 : vector<1x1xf32> to vector<1x1x1xf32>
    %17 = vector.broadcast %16 : vector<1x1x1xf32> to vector<1x8x1xf32>
    %18 = arith.subf %14, %17 : vector<1x8x1xf32>
    %19 = math.exp %18 : vector<1x8x1xf32>
    %cst_10 = arith.constant dense<0.000000e+00> : vector<1x1xf32>
    %20 = vector.multi_reduction <add>, %19, %cst_10 [1] : vector<1x8x1xf32> to vector<1x1xf32>
    %21 = vector.shape_cast %20 : vector<1x1xf32> to vector<1x1x1xf32>
    %22 = vector.broadcast %21 : vector<1x1x1xf32> to vector<1x8x1xf32>
    %23 = arith.divf %19, %22 : vector<1x8x1xf32>
    %cst_11 = arith.constant 1.000000e+00 : f32
    %24 = vector.broadcast %cst_11 : f32 to vector<1x8x1xf32>
    %25 = arith.addf %24, %23 : vector<1x8x1xf32>
    %26 = vector.broadcast %25 : vector<1x8x1xf32> to vector<1x8x32xf32>
    %27 = arith.mulf %0, %26 : vector<1x8x32xf32>
    %cst_12 = arith.constant dense<0.000000e+00> : vector<1x8xf32>
    %28 = vector.multi_reduction <add>, %27, %cst_12 [2] : vector<1x8x32xf32> to vector<1x8xf32>
    %29 = vector.shape_cast %28 : vector<1x8xf32> to vector<1x8x1xf32>
    %cst_13 = arith.constant 3.200000e+01 : f32
    %30 = vector.broadcast %cst_13 : f32 to vector<1x8x1xf32>
    %31 = arith.divf %29, %30 : vector<1x8x1xf32>
    %32 = vector.broadcast %31 : vector<1x8x1xf32> to vector<1x8x32xf32>
    %33 = arith.subf %27, %32 : vector<1x8x32xf32>
    %34 = arith.mulf %33, %33 : vector<1x8x32xf32>
    %cst_14 = arith.constant dense<0.000000e+00> : vector<1x8xf32>
    %35 = vector.multi_reduction <add>, %34, %cst_14 [2] : vector<1x8x32xf32> to vector<1x8xf32>
    %36 = vector.shape_cast %35 : vector<1x8xf32> to vector<1x8x1xf32>
    %cst_15 = arith.constant 3.200000e+01 : f32
    %37 = vector.broadcast %cst_15 : f32 to vector<1x8x1xf32>
    %38 = arith.divf %36, %37 : vector<1x8x1xf32>
    %39 = vector.broadcast %31 : vector<1x8x1xf32> to vector<1x8x32xf32>
    %40 = arith.subf %27, %39 : vector<1x8x32xf32>
    %cst_16 = arith.constant 9.99999974E-6 : f32
    %41 = vector.broadcast %cst_16 : f32 to vector<1x8x1xf32>
    %42 = arith.addf %38, %41 : vector<1x8x1xf32>
    %43 = math.rsqrt %42 : vector<1x8x1xf32>
    %44 = vector.broadcast %43 : vector<1x8x1xf32> to vector<1x8x32xf32>
    %45 = arith.mulf %40, %44 : vector<1x8x32xf32>
    %c0_17 = arith.constant 0 : index
    %c0_18 = arith.constant 0 : index
    %46 = vector.load %arg5[%c0_17, %c0_18] : memref<1x32xf32, #tpu.memory_space<vmem>>, vector<1x32xf32>
    %47 = vector.shape_cast %46 : vector<1x32xf32> to vector<1x1x32xf32>
    %48 = vector.broadcast %47 : vector<1x1x32xf32> to vector<1x8x32xf32>
    %49 = arith.mulf %45, %48 : vector<1x8x32xf32>
    %c0_19 = arith.constant 0 : index
    %c0_20 = arith.constant 0 : index
    %50 = vector.load %arg6[%c0_19, %c0_20] : memref<1x32xf32, #tpu.memory_space<vmem>>, vector<1x32xf32>
    %51 = vector.shape_cast %50 : vector<1x32xf32> to vector<1x1x32xf32>
    %52 = vector.broadcast %51 : vector<1x1x32xf32> to vector<1x8x32xf32>
    %53 = arith.addf %49, %52 : vector<1x8x32xf32>
    %c0_21 = arith.constant 0 : index
    %c0_22 = arith.constant 0 : index
    %c0_23 = arith.constant 0 : index
    %54 = vector.load %arg7[%c0_21, %c0_22, %c0_23] : memref<1x8x32xf32, #tpu.memory_space<vmem>>, vector<1x8x32xf32>
    tpu.vector_store %arg7[%c0_21, %c0_22, %c0_23], %53 {strides = array<i32>} : memref<1x8x32xf32, #tpu.memory_space<vmem>>, vector<1x8x32xf32>,
    return
  }
  func.func @transform_0(%arg0: i32) -> (i32, i32, i32) {
    %c0_i32 = arith.constant 0 : i32
    %c0_i32_0 = arith.constant 0 : i32
    %c0_i32_1 = arith.constant 0 : i32
    return %arg0, %c0_i32, %c0_i32_0 : i32, i32, i32
  }
  func.func @transform_1(%arg0: i32) -> (i32, i32) {
    %c0_i32 = arith.constant 0 : i32
    %c0_i32_0 = arith.constant 0 : i32
    %c0_i32_1 = arith.constant 0 : i32
    return %c0_i32, %c0_i32_0 : i32, i32
  }
  func.func @transform_2(%arg0: i32) -> (i32, i32) {
    %c0_i32 = arith.constant 0 : i32
    %c0_i32_0 = arith.constant 0 : i32
    %c0_i32_1 = arith.constant 0 : i32
    return %c0_i32, %c0_i32_0 : i32, i32
  }
  func.func @transform_3(%arg0: i32) -> (i32, i32) {
    %c0_i32 = arith.constant 0 : i32
    %c0_i32_0 = arith.constant 0 : i32
    %c0_i32_1 = arith.constant 0 : i32
    return %c0_i32, %c0_i32_0 : i32, i32
  }
  func.func @transform_4(%arg0: i32) -> (i32, i32) {
    %c0_i32 = arith.constant 0 : i32
    %c0_i32_0 = arith.constant 0 : i32
    %c0_i32_1 = arith.constant 0 : i32
    return %c0_i32, %c0_i32_0 : i32, i32
  }
  func.func @transform_5(%arg0: i32) -> (i32, i32) {
    %c0_i32 = arith.constant 0 : i32
    %c0_i32_0 = arith.constant 0 : i32
    %c0_i32_1 = arith.constant 0 : i32
    return %c0_i32, %c0_i32_0 : i32, i32
  }
  func.func @transform_6(%arg0: i32) -> (i32, i32, i32) {
    %c0_i32 = arith.constant 0 : i32
    %c0_i32_0 = arith.constant 0 : i32
    %c0_i32_1 = arith.constant 0 : i32
    return %arg0, %c0_i32, %c0_i32_0 : i32, i32, i32
  }
}

</mosaic_0001>

<llo_original>
// kernel: tpu_custom_call.1
$region0: #{tpu_custom_call.1}
  #allocation0 [shape = 'u32[]', space=smem, size = 0x4, offset = 0x4, fixed_abs, tag = 'smem constant byte address 0x4 - core index']
  #allocation1 [shape = 'u32[144,128]{1,0:T(1,128)}', space=vmem, size = 0x12000, scoped, tag = 'internal scratch']
  %s0 = inlined_call_operand.hbm [shape: f32[2,8,32], index: 0, kind: input, shape index: {}]
  %s1 = inlined_call_operand.hbm [shape: bf16[32,32], index: 1, kind: input, shape index: {}]
  %s2 = inlined_call_operand.vmem [shape: f32[1,32], index: 2, kind: input, shape index: {}]
  %s3 = inlined_call_operand.vmem [shape: f32[1,32], index: 3, kind: input, shape index: {}]
  %s4 = inlined_call_operand.vmem [shape: f32[1,32], index: 4, kind: input, shape index: {}]
  %s5 = inlined_call_operand.vmem [shape: f32[1,32], index: 5, kind: input, shape index: {}]
  %s6 = inlined_call_operand.hbm [shape: f32[2,8,32], index: 6, kind: output, shape index: {}]
  %s7 = sld [smem:[#allocation0]]
  $region65: #{tpu_custom_call.1} parent=0
    _
  %s9 = ssub.s32 1, %s7
  %s10 = scalar_select 0, %s9, %s7
  $region1: #{tpu_custom_call.1} parent=0
    #allocation2 [shape = 'u8[8192]{0}', space=vmem, size = 0x2000, scoped, tag = 'input window, operand 0']
    #allocation3 [shape = 's32[2]{0}', space=sflag, size = 0x8, scoped, tag = 'scoped memory for tpu_custom_call.1']
    #allocation4 [shape = 's32[2]{0}', space=sflag, size = 0x8, scoped, tag = 'scoped memory for tpu_custom_call.1']
    #allocation5 [shape = 'u8[8192]{0}', space=vmem, size = 0x2000, scoped, tag = 'input window, operand 1, single buffered']
    #allocation6 [shape = 's32[1]{0}', space=sflag, size = 0x4, scoped, tag = 'scoped memory for tpu_custom_call.1']
    #allocation7 [shape = 'u8[8192]{0}', space=vmem, size = 0x2000, scoped, tag = 'output window, operand 0']
    %11 = vsyncpa [#allocation3], 0
    %s12 = scalar_lea.sflag [#allocation3], 1
    %13 = vsyncpa %s12, 0
    %14 = vsyncpa [#allocation6], 0
    %15 = vsyncpa [#allocation4], 0
    %s16 = scalar_lea.sflag [#allocation4], 1
    %17 = vsyncpa %s16, 0
    loop: start=0, step=1, limit=4
    $region2: #{tpu_custom_call.1} parent=1 // loop_pre_header
      _
    $region3: #{tpu_custom_call.1} parent=1 // loop_header
      %s19 = sphi 0, %s23
      %p20 = scmp.ge.s32.totalorder %s19, 4
      %s29 = sphi 0, %s31
      %s32 = sphi 0, %s29
      %s33 = sphi 0, %s32
      %s49 = sphi 0, %s33
      %s53 = sphi 0, %s53
      %s55 = sphi 0, %s53
      %s56 = sphi 0, %s55
      %s70 = sphi 0, %s56
      %s74 = sphi 0, %s74
      %s76 = sphi 0, %s74
      %s77 = sphi 0, %s76
      %s91 = sphi 0, %s77
      %s95 = sphi 0, %s95
      %s97 = sphi 0, %s95
      %s98 = sphi 0, %s97
      %s112 = sphi 0, %s98
      %s116 = sphi 0, %s116
      %s118 = sphi 0, %s116
      %s119 = sphi 0, %s118
      %s133 = sphi 0, %s119
      %s137 = sphi 0, %s137
      %s139 = sphi 0, %s137
      %s140 = sphi 0, %s139
      %s154 = sphi 0, %s140
      %s160 = sphi 0, %s162
      %s163 = sphi 0, %s160
      %s164 = sphi 0, %s163
      %s180 = sphi 0, %s164
    $region4: #{tpu_custom_call.1} parent=1 // loop_header_branch
      %22 = sbr.rel (%p20) target = $region8
    $region5: #{tpu_custom_call.1} parent=1 // loop_body
      %s24 = ssub.s32 %s19, 1
      %s25 = ssub.s32 %s19, 2
      %s26 = sadd.s32 %s19, 1
      %s27 = ssub.s32 %s19, %s26
      %p28 = scmp.eq.s32.totalorder %s27, 0
      %s30 = sadd.s32 %s29, 1
      %s31 = scalar_select %p28, %s29, %s30
      %p34 = pneg %p28
      %p35 = scmp.eq.s32.totalorder %s19, 1
      %p36 = por %p34, %p35
      %p37 = scmp.ne.s32.totalorder %s29, %s32
      %p38 = scmp.eq.s32.totalorder %s19, 0
      %p39 = por %p37, %p38
      %p40 = scmp.ne.s32.totalorder %s29, %s32
      %p41 = scmp.eq.s32.totalorder %s24, 1
      %p42 = por %p40, %p41
      %p43 = scmp.ne.s32.totalorder %s32, %s33
      %p44 = scmp.eq.s32.totalorder %s24, 0
      %p45 = por %p43, %p44
      %p46 = scmp.ne.s32.totalorder %s32, %s33
      %p47 = scmp.eq.s32.totalorder %s25, 1
      %p48 = por %p46, %p47
      %p50 = scmp.ne.s32.totalorder %s33, %s49
      %p51 = scmp.eq.s32.totalorder %s25, 0
      %p52 = por %p50, %p51
      %s54 = sadd.s32 %s53, 1
      %p57 = scmp.eq.s32.totalorder %s19, 1
      %p58 = scmp.ne.s32.totalorder %s53, %s55
      %p59 = scmp.eq.s32.totalorder %s19, 0
      %p60 = por %p58, %p59
      %p61 = scmp.ne.s32.totalorder %s53, %s55
      %p62 = scmp.eq.s32.totalorder %s24, 1
      %p63 = por %p61, %p62
      %p64 = scmp.ne.s32.totalorder %s55, %s56
      %p65 = scmp.eq.s32.totalorder %s24, 0
      %p66 = por %p64, %p65
      %p67 = scmp.ne.s32.totalorder %s55, %s56
      %p68 = scmp.eq.s32.totalorder %s25, 1
      %p69 = por %p67, %p68
      %p71 = scmp.ne.s32.totalorder %s56, %s70
      %p72 = scmp.eq.s32.totalorder %s25, 0
      %p73 = por %p71, %p72
      %s75 = sadd.s32 %s74, 1
      %p78 = scmp.eq.s32.totalorder %s19, 1
      %p79 = scmp.ne.s32.totalorder %s74, %s76
      %p80 = scmp.eq.s32.totalorder %s19, 0
      %p81 = por %p79, %p80
      %p82 = scmp.ne.s32.totalorder %s74, %s76
      %p83 = scmp.eq.s32.totalorder %s24, 1
      %p84 = por %p82, %p83
      %p85 = scmp.ne.s32.totalorder %s76, %s77
      %p86 = scmp.eq.s32.totalorder %s24, 0
      %p87 = por %p85, %p86
      %p88 = scmp.ne.s32.totalorder %s76, %s77
      %p89 = scmp.eq.s32.totalorder %s25, 1
      %p90 = por %p88, %p89
      %p92 = scmp.ne.s32.totalorder %s77, %s91
      %p93 = scmp.eq.s32.totalorder %s25, 0
      %p94 = por %p92, %p93
      %s96 = sadd.s32 %s95, 1
      %p99 = scmp.eq.s32.totalorder %s19, 1
      %p100 = scmp.ne.s32.totalorder %s95, %s97
      %p101 = scmp.eq.s32.totalorder %s19, 0
      %p102 = por %p100, %p101
      %p103 = scmp.ne.s32.totalorder %s95, %s97
      %p104 = scmp.eq.s32.totalorder %s24, 1
      %p105 = por %p103, %p104
      %p106 = scmp.ne.s32.totalorder %s97, %s98
      %p107 = scmp.eq.s32.totalorder %s24, 0
      %p108 = por %p106, %p107
      %p109 = scmp.ne.s32.totalorder %s97, %s98
      %p110 = scmp.eq.s32.totalorder %s25, 1
      %p111 = por %p109, %p110
      %p113 = scmp.ne.s32.totalorder %s98, %s112
      %p114 = scmp.eq.s32.totalorder %s25, 0
      %p115 = por %p113, %p114
      %s117 = sadd.s32 %s116, 1
      %p120 = scmp.eq.s32.totalorder %s19, 1
      %p121 = scmp.ne.s32.totalorder %s116, %s118
      %p122 = scmp.eq.s32.totalorder %s19, 0
      %p123 = por %p121, %p122
      %p124 = scmp.ne.s32.totalorder %s116, %s118
      %p125 = scmp.eq.s32.totalorder %s24, 1
      %p126 = por %p124, %p125
      %p127 = scmp.ne.s32.totalorder %s118, %s119
      %p128 = scmp.eq.s32.totalorder %s24, 0
      %p129 = por %p127, %p128
      %p130 = scmp.ne.s32.totalorder %s118, %s119
      %p131 = scmp.eq.s32.totalorder %s25, 1
      %p132 = por %p130, %p131
      %p134 = scmp.ne.s32.totalorder %s119, %s133
      %p135 = scmp.eq.s32.totalorder %s25, 0
      %p136 = por %p134, %p135
      %s138 = sadd.s32 %s137, 1
      %p141 = scmp.eq.s32.totalorder %s19, 1
      %p142 = scmp.ne.s32.totalorder %s137, %s139
      %p143 = scmp.eq.s32.totalorder %s19, 0
      %p144 = por %p142, %p143
      %p145 = scmp.ne.s32.totalorder %s137, %s139
      %p146 = scmp.eq.s32.totalorder %s24, 1
      %p147 = por %p145, %p146
      %p148 = scmp.ne.s32.totalorder %s139, %s140
      %p149 = scmp.eq.s32.totalorder %s24, 0
      %p150 = por %p148, %p149
      %p151 = scmp.ne.s32.totalorder %s139, %s140
      %p152 = scmp.eq.s32.totalorder %s25, 1
      %p153 = por %p151, %p152
      %p155 = scmp.ne.s32.totalorder %s140, %s154
      %p156 = scmp.eq.s32.totalorder %s25, 0
      %p157 = por %p155, %p156
      %s158 = ssub.s32 %s19, %s26
      %p159 = scmp.eq.s32.totalorder %s158, 0
      %s161 = sadd.s32 %s160, 1
      %s162 = scalar_select %p159, %s160, %s161
      %p165 = pneg %p159
      %p166 = scmp.eq.s32.totalorder %s19, 1
      %p167 = por %p165, %p166
      %p168 = scmp.ne.s32.totalorder %s160, %s163
      %p169 = scmp.eq.s32.totalorder %s19, 0
      %p170 = por %p168, %p169
      %p171 = scmp.ne.s32.totalorder %s160, %s163
      %p172 = scmp.eq.s32.totalorder %s24, 1
      %p173 = por %p171, %p172
      %p174 = scmp.ne.s32.totalorder %s163, %s164
      %p175 = scmp.eq.s32.totalorder %s24, 0
      %p176 = por %p174, %p175
      %p177 = scmp.ne.s32.totalorder %s163, %s164
      %p178 = scmp.eq.s32.totalorder %s25, 1
      %p179 = por %p177, %p178
      %p181 = scmp.ne.s32.totalorder %s164, %s180
      %p182 = scmp.eq.s32.totalorder %s25, 0
      %p183 = por %p181, %p182
      %p184 = scmp.le.s32.totalorder 1, %s19
      %p185 = scmp.lt.s32.totalorder %s19, 3
      %p186 = pnand %p184, %p185
      %p187 = pneg %p186
      // Predicated region
      $region9: #{tpu_custom_call.1} parent=5 // pred_check
        _
      $region10: #{tpu_custom_call.1} parent=5 // pred_check_branch
        %189 = sbr.rel (%p186) target = $region12
      $region11: #{tpu_custom_call.1} parent=5 // pred_region
        %s190 = ssub.s32 %s19, 1
        // Predicated region
        $region13: #{tpu_custom_call.1} parent=11 // pred_check
          %p191 = pneg %p66
        $region14: #{tpu_custom_call.1} parent=11 // pred_check_branch
          %193 = sbr.rel (%p191) target = $region16
        $region15: #{tpu_custom_call.1} parent=11 // pred_region
          %s195 = ssub.s32 256, 256
          %196 = vsyncadd [#allocation6], %s195
          %s197 = sshll.u32 [#allocation5], 4
          %s198 = int_to_ptr.vmem [resolvable:$true] %s197
          %203 = dma.hbm_to_vmem [thread:$0]  %s1, 256, %s198, [#allocation6], 64, 64, 4
        $region16: #{tpu_custom_call.1} parent=11 // pred_fallthru
          _
        // Predicated region
        $region17: #{tpu_custom_call.1} parent=11 // pred_check
          %p204 = pneg %p87
        $region18: #{tpu_custom_call.1} parent=11 // pred_check_branch
          %206 = sbr.rel (%p204) target = $region20
        $region19: #{tpu_custom_call.1} parent=11 // pred_region
          _
        $region20: #{tpu_custom_call.1} parent=11 // pred_fallthru
          _
        // Predicated region
        $region21: #{tpu_custom_call.1} parent=11 // pred_check
          %p207 = pneg %p108
        $region22: #{tpu_custom_call.1} parent=11 // pred_check_branch
          %209 = sbr.rel (%p207) target = $region24
        $region23: #{tpu_custom_call.1} parent=11 // pred_region
          _
        $region24: #{tpu_custom_call.1} parent=11 // pred_fallthru
          _
        // Predicated region
        $region25: #{tpu_custom_call.1} parent=11 // pred_check
          %p210 = pneg %p129
        $region26: #{tpu_custom_call.1} parent=11 // pred_check_branch
          %212 = sbr.rel (%p210) target = $region28
        $region27: #{tpu_custom_call.1} parent=11 // pred_region
          _
        $region28: #{tpu_custom_call.1} parent=11 // pred_fallthru
          _
        // Predicated region
        $region29: #{tpu_custom_call.1} parent=11 // pred_check
          %p213 = pneg %p150
        $region30: #{tpu_custom_call.1} parent=11 // pred_check_branch
          %215 = sbr.rel (%p213) target = $region32
        $region31: #{tpu_custom_call.1} parent=11 // pred_region
          _
        $region32: #{tpu_custom_call.1} parent=11 // pred_fallthru
          _
      $region12: #{tpu_custom_call.1} parent=5 // pred_fallthru
        _
      %p216 = scmp.lt.s32.totalorder %s19, 2
      // Predicated region
      $region33: #{tpu_custom_call.1} parent=5 // pred_check
        %p217 = pneg %p216
      $region34: #{tpu_custom_call.1} parent=5 // pred_check_branch
        %219 = sbr.rel (%p217) target = $region36
      $region35: #{tpu_custom_call.1} parent=5 // pred_region
        // Predicated region
        $region37: #{tpu_custom_call.1} parent=35 // pred_check
          %p220 = pneg %p39
        $region38: #{tpu_custom_call.1} parent=35 // pred_check_branch
          %222 = sbr.rel (%p220) target = $region40
        $region39: #{tpu_custom_call.1} parent=35 // pred_region
          %s223 = sand.u32 %s29, 1
          %s224 = scalar_lea.sflag [#allocation3], %s223
          %s225 = sand.u32 %s29, 1
          %s226 = smul.addr %s225, 8
          %s227 = scalar_lea.vmem [#allocation2], %s226
          %s229 = ssub.s32 128, 128
          %230 = vsyncadd %s224, %s229
          %s231 = smul.addr %s19, 128
          %s232 = scalar_lea.hbm %s0, %s231
          %s234 = sshll.u32 %s227, 4
          %s235 = int_to_ptr.vmem [resolvable:$true] %s234
          %237 = dma.hbm_to_vmem [thread:$0]  %s232, 128, %s235, %s224
        $region40: #{tpu_custom_call.1} parent=35 // pred_fallthru
          _
      $region36: #{tpu_custom_call.1} parent=5 // pred_fallthru
        _
      %p238 = scmp.le.s32.totalorder 1, %s19
      %p239 = scmp.lt.s32.totalorder %s19, 3
      %p240 = pnand %p238, %p239
      %p241 = pneg %p240
      // Predicated region
      $region41: #{tpu_custom_call.1} parent=5 // pred_check
        _
      $region42: #{tpu_custom_call.1} parent=5 // pred_check_branch
        %243 = sbr.rel (%p240) target = $region44
      $region43: #{tpu_custom_call.1} parent=5 // pred_region
        %s244 = ssub.s32 %s19, 1
        %s245 = sand.u32 %s32, 1
        %s246 = scalar_lea.sflag [#allocation3], %s245
        %s247 = sand.u32 %s32, 1
        %s248 = smul.addr %s247, 8
        %s249 = scalar_lea.vmem [#allocation2], %s248
        // Predicated region
        $region45: #{tpu_custom_call.1} parent=43 // pred_check
          %p250 = pneg %p45
        $region46: #{tpu_custom_call.1} parent=43 // pred_check_branch
          %252 = sbr.rel (%p250) target = $region48
        $region47: #{tpu_custom_call.1} parent=43 // pred_region
          %253 = dma.done %s246, 128
        $region48: #{tpu_custom_call.1} parent=43 // pred_fallthru
          _
        // Predicated region
        $region49: #{tpu_custom_call.1} parent=43 // pred_check
          %p254 = pneg %p66
        $region50: #{tpu_custom_call.1} parent=43 // pred_check_branch
          %256 = sbr.rel (%p254) target = $region52
        $region51: #{tpu_custom_call.1} parent=43 // pred_region
          %257 = dma.done [#allocation6], 256
        $region52: #{tpu_custom_call.1} parent=43 // pred_fallthru
          _
        %s258 = sand.u32 %s32, 1
        %s259 = scalar_lea.sflag [#allocation3], %s258
        %s260 = sand.u32 %s32, 1
        %s261 = smul.addr %s260, 8
        %s262 = scalar_lea.vmem [#allocation2], %s261
        %p263 = pneg %p45
        %p264 = pneg %p42
        %p265 = pneg %p66
        %p266 = pneg %p63
        %p267 = pneg %p87
        %p268 = pneg %p84
        %p269 = pneg %p108
        %p270 = pneg %p105
        %p271 = pneg %p129
        %p272 = pneg %p126
        %p273 = pneg %p150
        %p274 = pneg %p147
        %p275 = pneg %p176
        %p276 = pneg %p173
        %s277 = sand.u32 %s163, 1
        %s278 = scalar_lea.sflag [#allocation4], %s277
        %s279 = sand.u32 %s163, 1
        %s280 = smul.addr %s279, 8
        %s281 = scalar_lea.vmem [#allocation7], %s280
        %v283 = vld [vmem:[%s249] sm:$0xff]
        %v284 = vpack.c.bf16 %v283, %v283
        %v285 = vld [vmem:[#allocation5] sm:$0xf]
        %v286 = vld [vmem:[#allocation5 + $0x4] sm:$0xf]
        %v287 = vld [vmem:[#allocation5 + $0x8] sm:$0xf]
        %v288 = vld [vmem:[#allocation5 + $0xc] sm:$0xf]
        %v289 = vld [vmem:[%s2] sm:$0x1]
        %v291 = vlaneseq
        %v292 = vshrl.u32 %v291, 7
        %v293 = vsub.s32 0, %v292
        %v294 = vrot.slane %v289, %v293
        %v300 = vunpack.c.l.b16 %v285
        %v301 = vunpack.c.l.b16 %v286
        %v302 = vunpack.c.l.b16 %v287
        %v303 = vunpack.c.l.b16 %v288
        %v304 = vpack.c.b16 %v301, %v300
        %v305 = vpack.c.b16 %v303, %v302
        %vm308 = vcmask 261120
        %v310 = vsel %vm308, %v284, 0
        %312 = vmatprep.subr.bf16.mxu0 0
        %313 = vmatpush1.bf16.msra.mxu0 0
        %314 = vmatprep.subr.bf16.mxu0 0
        %315 = vmatpush1.bf16.msra.mxu0 0
        %316 = vmatprep.subr.bf16.mxu0 0
        %317 = vmatpush1.bf16.msra.mxu0 0
        %318 = vmatprep.subr.bf16.mxu0 0
        %319 = vmatpush1.bf16.msra.mxu0 0
        %320 = vmatprep.subr.bf16.mxu0 0
        %321 = vmatpush1.bf16.msra.mxu0 0
        %322 = vmatprep.subr.bf16.mxu0 0
        %323 = vmatpush1.bf16.msra.mxu0 0
        %324 = vmatprep.subr.bf16.mxu0 0
        %325 = vmatpush1.bf16.msra.mxu0 %v305
        %326 = vmatprep.subr.bf16.mxu0 0
        %327 = vmatpush1.bf16.msra.mxu0 %v304
        %328 = vmatprep.subr.bf16.mxu0 0
        %329 = vmatpush2.bf16.msra.mxu0 0
        %330 = vmatprep.subr.bf16.mxu0 0
        %331 = vmatpush2.bf16.msra.mxu0 0
        %332 = vmatprep.subr.bf16.mxu0 0
        %333 = vmatpush2.bf16.msra.mxu0 0
        %334 = vmatprep.subr.bf16.mxu0 0
        %335 = vmatpush2.bf16.msra.mxu0 0
        %336 = vmatprep.subr.bf16.mxu0 0
        %337 = vmatpush2.bf16.msra.mxu0 0
        %338 = vmatprep.subr.bf16.mxu0 0
        %339 = vmatpush2.bf16.msra.mxu0 0
        %340 = vmatprep.subr.bf16.mxu0 0
        %341 = vmatpush2.bf16.msra.mxu0 0
        %342 = vmatprep.subr.bf16.mxu0 0
        %343 = vmatpush2.bf16.msra.mxu0 0
        %344 = vmatprep.mubr.bf16.mxu0 0
        %345 = vmatmul.mubr.bf16.gmra.mxu0 %v310
        %v346 = vpop.f32.mrf.mxu0
        %v347 = vadd.f32 %v294, %v346
        %v348 = vpop.f32.mrf.mxu0
        %v349 = vpop.f32.mrf.mxu0
        %v350 = vpop.f32.mrf.mxu0
        %351 = vdwg.mxu0
        %v352 = vtanh.pop %v347
        %v353 = vld [vmem:[%s3] sm:$0x1]
        %v355 = vlaneseq
        %v356 = vshrl.u32 %v355, 7
        %v357 = vsub.s32 0, %v356
        %v358 = vrot.slane %v353, %v357
        %v360 = vmul.f32 %v352, %v358
        %v361 = vsel %vm308, %v360, 0.0
        %362 = vadd.xlane.f32.xlu0 %v361
        %v363 = vpop.xlane.xlu0 %362
        %v364 = vrot.slane %v363, 4
        %v365 = vmax.f32 %v363, %v364
        %v366 = vrot.slane %v365, 2
        %v367 = vmax.f32 %v365, %v366
        %v368 = vrot.slane %v367, 1
        %v369 = vmax.f32 %v367, %v368
        %v370 = vsub.f32 %v363, %v369
        %v371 = vmul.f32 %v370, 1.442695
        %v372 = vpow.pop %v371
        %v373 = vrot.slane %v372, 4
        %v374 = vadd.f32 %v372, %v373
        %v375 = vrot.slane %v374, 2
        %v376 = vadd.f32 %v374, %v375
        %v377 = vrot.slane %v376, 1
        %v378 = vadd.f32 %v376, %v377
        %v379 = vrcp.pop %v378
        %v380 = vmul.f32 %v372, %v379
        %v381 = vadd.f32 %v380, 1.0
        %v382 = vmul.f32 %v283, %v381
        %v383 = vsel %vm308, %v382, 0.0
        %384 = vadd.xlane.f32.xlu0 %v383
        %v385 = vpop.xlane.xlu0 %384
        %v386 = vrcp.pop 32.0
        %v387 = vmul.f32 %v385, %v386
        %v388 = vsub.f32 %v382, %v387
        %v389 = vmul.f32 %v388, %v388
        %v390 = vsel %vm308, %v389, 0.0
        %391 = vadd.xlane.f32.xlu0 %v390
        %v392 = vpop.xlane.xlu0 %391
        %v393 = vmul.f32 %v392, %v386
        %v394 = vadd.f32 %v393, 1e-05
        %v395 = vrsqrt.pop %v394
        %v396 = vmul.f32 %v388, %v395
        %v397 = vld [vmem:[%s4] sm:$0x1]
        %v399 = vlaneseq
        %v400 = vshrl.u32 %v399, 7
        %v401 = vsub.s32 0, %v400
        %v402 = vrot.slane %v397, %v401
        %v404 = vmul.f32 %v396, %v402
        %v405 = vld [vmem:[%s5] sm:$0x1]
        %v407 = vlaneseq
        %v408 = vshrl.u32 %v407, 7
        %v409 = vsub.s32 0, %v408
        %v410 = vrot.slane %v405, %v409
        %v412 = vadd.f32 %v404, %v410
        %413 = vst.msk [vmem:[%s281] sm:$0xff] %vm308, %v412
        %s414 = sand.u32 %s163, 1
        %s415 = scalar_lea.sflag [#allocation4], %s414
        %s416 = sand.u32 %s163, 1
        %s417 = smul.addr %s416, 8
        %s418 = scalar_lea.vmem [#allocation7], %s417
        // Predicated region
        $region53: #{tpu_custom_call.1} parent=43 // pred_check
          %p419 = pneg %p173
        $region54: #{tpu_custom_call.1} parent=43 // pred_check_branch
          %421 = sbr.rel (%p419) target = $region56
        $region55: #{tpu_custom_call.1} parent=43 // pred_region
          %s423 = ssub.s32 128, 128
          %424 = vsyncadd %s415, %s423
          %s425 = smul.addr %s24, 128
          %s426 = scalar_lea.hbm %s6, %s425
          %s428 = sshll.u32 %s418, 4
          %s429 = int_to_ptr.vmem [resolvable:$true] %s428
          %431 = dma.vmem_to_hbm [thread:$0]  %s429, 128, %s426, %s415
        $region56: #{tpu_custom_call.1} parent=43 // pred_fallthru
          _
      $region44: #{tpu_custom_call.1} parent=5 // pred_fallthru
        _
      %p432 = scmp.le.s32.totalorder 2, %s19
      // Predicated region
      $region57: #{tpu_custom_call.1} parent=5 // pred_check
        %p433 = pneg %p432
      $region58: #{tpu_custom_call.1} parent=5 // pred_check_branch
        %435 = sbr.rel (%p433) target = $region60
      $region59: #{tpu_custom_call.1} parent=5 // pred_region
        %s436 = ssub.s32 %s19, 2
        // Predicated region
        $region61: #{tpu_custom_call.1} parent=59 // pred_check
          %p437 = pneg %p179
        $region62: #{tpu_custom_call.1} parent=59 // pred_check_branch
          %439 = sbr.rel (%p437) target = $region64
        $region63: #{tpu_custom_call.1} parent=59 // pred_region
          %s440 = sand.u32 %s164, 1
          %s441 = scalar_lea.sflag [#allocation4], %s440
          %s442 = sand.u32 %s164, 1
          %s443 = smul.addr %s442, 8
          %s444 = scalar_lea.vmem [#allocation7], %s443
          %445 = dma.done %s441, 128
        $region64: #{tpu_custom_call.1} parent=59 // pred_fallthru
          _
      $region60: #{tpu_custom_call.1} parent=5 // pred_fallthru
        _
    $region6: #{tpu_custom_call.1} parent=1 // loop_footer
      %s23 = sadd.s32 1, %s19
    $region7: #{tpu_custom_call.1} parent=1 // loop_footer_branch
      %18 = sbr.rel target = $region3
    $region8: #{tpu_custom_call.1} parent=1 // loop_exit
      _
    %446 = vsyncpa [#allocation3], 1
    %s447 = scalar_lea.sflag [#allocation3], 1
    %448 = vsyncpa %s447, 1
    %449 = vsyncpa [#allocation6], 1
    %450 = vsyncpa [#allocation4], 1
    %s451 = scalar_lea.sflag [#allocation4], 1
    %452 = vsyncpa %s451, 1

</llo_original>
